<compile_context>
chip_gen: v5e
topology: v5e:2x2
jax: 0.10.0
libtpu: 0.0.40
codegen_flags: <defaults>
</compile_context>

<pallas_src>
import functools
import math

import jax
import jax.numpy as jnp
from jax.experimental import pallas as pl
from jax.experimental.pallas import tpu as pltpu


# ----------------------------------------------------------------------------- helpers
def _round_up(x, m):
    return (x + m - 1) // m * m


@functools.lru_cache(maxsize=None)
def _hw_defaults():
    """(vmem_limit_bytes, seq_tile_cap, vocab_tile_cap) for the local TPU generation."""
    try:
        vmem_bytes = pltpu.get_tpu_info().vmem_capacity_bytes
    except Exception:
        return 48 * 1024 * 1024, 256, 1024          # conservative fallback (proven config)
    if vmem_bytes <= 64 * 1024 * 1024:              # v7x-class: 64 MiB physical VMEM
        return 40 * 1024 * 1024, 256, 1024
    return 64 * 1024 * 1024, 512, 2048              # v5e / v6e: 128 MiB physical VMEM


def _seq_tile(t, cap):
    """Largest sequence tile <= cap dividing t (multiple of 8), or full t if t <= cap."""
    if t <= cap:
        return t
    for cand in range(cap, 7, -1):
        if t % cand == 0 and cand % 8 == 0:
            return cand
    return t


def _vocab_tiles(v, cap):
    """(padded_vocab, vocab_tile); both multiples of 128, padded_vocab % tile == 0."""
    tile = min(cap, _round_up(v, 128))
    return _round_up(v, tile), tile


def _layer_norm(x, gamma, eps=1e-5):
    # x: (T, C) f32, gamma: (C,); LayerNorm with bias=False, PyTorch default eps.
    mu = jnp.mean(x, axis=-1, keepdims=True)
    var = jnp.mean(jnp.square(x - mu), axis=-1, keepdims=True)
    return (x - mu) * jax.lax.rsqrt(var + eps) * gamma


# ----------------------------------------------------------------------------- kernels
def _qkv_kernel(x_ref, g_ref, wqkv_ref, q_ref, k_ref, v_ref, *, n_heads):
    """LN1 + fused qkv projection for one (batch, seq-tile); heads stored head-major.

    The 1/sqrt(Dh) scale is folded into the Q columns of wqkv at init.  The head split
    stays here (Dh < 128 must be a full minor dim for the attention BlockSpecs); it is a
    single store per tensor and amortizes over the entire KV loop downstream.
    """
    x = x_ref[0]                                            # (TT, C) f32
    c = x.shape[-1]
    dh = c // n_heads
    h = _layer_norm(x, g_ref[0]).astype(jnp.bfloat16)
    qkv = jnp.dot(h, wqkv_ref[...],
                  preferred_element_type=jnp.float32).astype(jnp.bfloat16)   # (TT, 3C)
    q_ref[0] = jnp.stack([qkv[:, hh * dh:(hh + 1) * dh] for hh in range(n_heads)], axis=0)
    k_ref[0] = jnp.stack([qkv[:, c + hh * dh:c + (hh + 1) * dh]
                          for hh in range(n_heads)], axis=0)
    v_ref[0] = jnp.stack([qkv[:, 2 * c + hh * dh:2 * c + (hh + 1) * dh]
                          for hh in range(n_heads)], axis=0)


def _flash_attn_kernel(qi_tbl_ref, ki_tbl_ref, q_ref, k_ref, v_ref, o_ref,
                       m_sc, l_sc, acc_sc, *, n_heads, tq, tk):
    """Causal flash attention over a flattened lower-triangular (qi, ki) grid.

    Only real (unmasked) KV tiles are ever visited; the causal mask is applied only on
    the diagonal tile.  The finalize step emits a lane-dense (TT, C) slab (heads
    concatenated along lanes) so the downstream projection is a single K=C matmul.
    """
    p_id = pl.program_id(1)
    qi = qi_tbl_ref[p_id]
    ki = ki_tbl_ref[p_id]

    @pl.when(ki == 0)
    def _():
        m_sc[...] = jnp.full(m_sc.shape, -jnp.inf, jnp.float32)
        l_sc[...] = jnp.zeros(l_sc.shape, jnp.float32)
        acc_sc[...] = jnp.zeros(acc_sc.shape, jnp.float32)

    q = q_ref[0]                                            # (H, TQ, Dh) bf16
    k = k_ref[0]                                            # (H, TK, Dh) bf16
    v = v_ref[0]                                            # (H, TK, Dh) bf16

    def online_softmax_update(s):
        m_prev = m_sc[...]
        m_new = jnp.maximum(m_prev, s.max(axis=-1, keepdims=True))
        alpha = jnp.exp(m_prev - m_new)
        p = jnp.exp(s - m_new)
        l_sc[...] = alpha * l_sc[...] + p.sum(axis=-1, keepdims=True)
        acc_sc[...] = alpha * acc_sc[...] + jnp.einsum(
            'hqk,hkd->hqd', p.astype(jnp.bfloat16), v,
            preferred_element_type=jnp.float32)
        m_sc[...] = m_new

    @pl.when(ki < qi)        # strictly-past KV tile: no causal mask work needed
    def _():
        s = jnp.einsum('hqd,hkd->hqk', q, k, preferred_element_type=jnp.float32)
        online_softmax_update(s)

    @pl.when(ki == qi)       # diagonal tile: in-tile causal mask, then finalize
    def _():
        s = jnp.einsum('hqd,hkd->hqk', q, k, preferred_element_type=jnp.float32)
        row = jax.lax.broadcasted_iota(jnp.int32, (tq, tk), 0)
        col = jax.lax.broadcasted_iota(jnp.int32, (tq, tk), 1)
        s = jnp.where((col <= row)[None, :, :], s, -1e30)
        online_softmax_update(s)
        # pl.reciprocal(approx=True): tiny relative error vs exact softmax division.
        out = acc_sc[...] * pl.reciprocal(l_sc[...], approx=True)   # (H, TQ, Dh) f32
        o_ref[0] = jnp.concatenate(
            [out[h] for h in range(n_heads)], axis=-1).astype(o_ref.dtype)   # (TQ, C)


def _proj_mlp_kernel(x_ref, attn_ref, wproj_ref, g2_ref, wfc_ref, wfc2_ref, o_ref):
    """Output projection (single K=C matmul) + residual + LN2 + MLP + residual."""
    x = x_ref[0]                                            # (TT, C) f32 residual stream
    proj = jnp.dot(attn_ref[0], wproj_ref[...],
                   preferred_element_type=jnp.float32)      # (TT, C); attn is lane-dense
    y = x + proj                                            # residual (dropout = identity, eval)

    h2 = _layer_norm(y, g2_ref[0]).astype(jnp.bfloat16)
    ff = jnp.dot(h2, wfc_ref[...], preferred_element_type=jnp.float32)        # (TT, 4C)
    ff = jax.nn.gelu(ff, approximate=False)                                   # exact GELU
    # NOTE: for very large C (>= ~1280) on 64-MiB-VMEM parts, chunk the 4C hidden dim
    # here (accumulating the second matmul) to bound VMEM; unnecessary at these sizes.
    ff = jnp.dot(ff.astype(jnp.bfloat16), wfc2_ref[...],
                 preferred_element_type=jnp.float32)                          # (TT, C)
    o_ref[0] = y + ff


def _lm_head_kernel(x_ref, g_ref, wte_t_ref, o_ref, h_sc):
    """Final LayerNorm (computed once per seq-tile) + tied lm_head, vocab-tiled."""
    @pl.when(pl.program_id(2) == 0)
    def _():
        h_sc[...] = _layer_norm(x_ref[0], g_ref[0]).astype(jnp.bfloat16)
    o_ref[0] = jnp.dot(h_sc[...], wte_t_ref[...],
                       preferred_element_type=jnp.float32)  # (TT, TILE_V)


# ----------------------------------------------------------------------------- wrappers
def transformer_block(x, blk, *, n_heads, tt, vmem_limit):
    B, Tp, C = x.shape
    assert C % n_heads == 0
    dh = C // n_heads
    nt = Tp // tt
    cp2 = pltpu.CompilerParams(dimension_semantics=("parallel", "parallel"),
                               vmem_limit_bytes=vmem_limit)

    # --- LN1 + qkv projection ------------------------------------------------
    q, k, v = pl.pallas_call(
        functools.partial(_qkv_kernel, n_heads=n_heads),
        grid=(B, nt),
        in_specs=[
            pl.BlockSpec((1, tt, C), lambda b, t: (b, t, 0)),
            pl.BlockSpec((1, C), lambda b, t: (0, 0)),
            pl.BlockSpec((C, 3 * C), lambda b, t: (0, 0)),
        ],
        out_specs=[
            pl.BlockSpec((1, n_heads, tt, dh), lambda b, t: (b, 0, t, 0)),
            pl.BlockSpec((1, n_heads, tt, dh), lambda b, t: (b, 0, t, 0)),
            pl.BlockSpec((1, n_heads, tt, dh), lambda b, t: (b, 0, t, 0)),
        ],
        out_shape=[
            jax.ShapeDtypeStruct((B, n_heads, Tp, dh), jnp.bfloat16),
            jax.ShapeDtypeStruct((B, n_heads, Tp, dh), jnp.bfloat16),
            jax.ShapeDtypeStruct((B, n_heads, Tp, dh), jnp.bfloat16),
        ],
        compiler_params=cp2,
    )(x, blk["ln1_g"], blk["wqkv"])

    # --- flash attention over a flattened lower-triangular (qi, ki) grid ------
    pairs = [(qi, ki) for qi in range(nt) for ki in range(qi + 1)]
    qi_tbl = jnp.asarray([p[0] for p in pairs], jnp.int32)
    ki_tbl = jnp.asarray([p[1] for p in pairs], jnp.int32)
    n_steps = len(pairs)

    attn = pl.pallas_call(
        functools.partial(_flash_attn_kernel, n_heads=n_heads, tq=tt, tk=tt),
        grid_spec=pltpu.PrefetchScalarGridSpec(
            num_scalar_prefetch=2,
            grid=(B, n_steps),
            in_specs=[
                pl.BlockSpec((1, n_heads, tt, dh),
                             lambda b, p, qi_t, ki_t: (b, 0, qi_t[p], 0)),
                pl.BlockSpec((1, n_heads, tt, dh),
                             lambda b, p, qi_t, ki_t: (b, 0, ki_t[p], 0)),
                pl.BlockSpec((1, n_heads, tt, dh),
                             lambda b, p, qi_t, ki_t: (b, 0, ki_t[p], 0)),
            ],
            out_specs=pl.BlockSpec((1, tt, C), lambda b, p, qi_t, ki_t: (b, qi_t[p], 0)),
            scratch_shapes=[
                pltpu.VMEM((n_heads, tt, 1), jnp.float32),
                pltpu.VMEM((n_heads, tt, 1), jnp.float32),
                pltpu.VMEM((n_heads, tt, dh), jnp.float32),
            ],
        ),
        out_shape=jax.ShapeDtypeStruct((B, Tp, C), jnp.bfloat16),
        compiler_params=pltpu.CompilerParams(
            dimension_semantics=("parallel", "arbitrary"),
            vmem_limit_bytes=vmem_limit),
    )(qi_tbl, ki_tbl, q, k, v)

    # --- output projection + residual + MLP + residual ------------------------
    return pl.pallas_call(
        _proj_mlp_kernel,
        grid=(B, nt),
        in_specs=[
            pl.BlockSpec((1, tt, C), lambda b, t: (b, t, 0)),
            pl.BlockSpec((1, tt, C), lambda b, t: (b, t, 0)),
            pl.BlockSpec((C, C), lambda b, t: (0, 0)),
            pl.BlockSpec((1, C), lambda b, t: (0, 0)),
            pl.BlockSpec((C, 4 * C), lambda b, t: (0, 0)),
            pl.BlockSpec((4 * C, C), lambda b, t: (0, 0)),
        ],
        out_specs=pl.BlockSpec((1, tt, C), lambda b, t: (b, t, 0)),
        out_shape=jax.ShapeDtypeStruct((B, Tp, C), jnp.float32),
        compiler_params=cp2,
    )(x, attn, blk["wproj"], blk["ln2_g"], blk["wfc"], blk["wfc2"])


def final_ln_and_lm_head(x, lnf_g, wte_t, *, vocab_size, tt, vocab_cap, vmem_limit):
    B, Tp, C = x.shape
    nt = Tp // tt
    Vp, tv = _vocab_tiles(vocab_size, vocab_cap)
    assert wte_t.shape == (C, Vp) and Vp % tv == 0
    nv = Vp // tv

    return pl.pallas_call(
        _lm_head_kernel,
        grid=(B, nt, nv),
        in_specs=[
            pl.BlockSpec((1, tt, C), lambda b, t, v: (b, t, 0)),
            pl.BlockSpec((1, C), lambda b, t, v: (0, 0)),
            pl.BlockSpec((C, tv), lambda b, t, v: (0, v)),
        ],
        out_specs=pl.BlockSpec((1, tt, tv), lambda b, t, v: (b, t, v)),
        out_shape=jax.ShapeDtypeStruct((B, Tp, Vp), jnp.float32),
        scratch_shapes=[pltpu.VMEM((tt, C), jnp.bfloat16)],
        compiler_params=pltpu.CompilerParams(
            dimension_semantics=("parallel", "parallel", "arbitrary"),
            vmem_limit_bytes=vmem_limit),
    )(x, lnf_g, wte_t)


# ----------------------------------------------------------------------------- params / forward
def init_params(key, cfg):
    C, V, L, S, H = (cfg["n_embed"], cfg["vocab_size"], cfg["n_layers"],
                     cfg["block_size"], cfg["n_heads"])
    dh = C // H
    _, _, vocab_cap = _hw_defaults()
    Vp, _ = _vocab_tiles(V, vocab_cap)
    std = 0.02
    scale = 1.0 / math.sqrt(dh)
    keys = jax.random.split(key, 2 + L)

    wte = jax.random.normal(keys[0], (V, C), jnp.float32) * std
    wte = jnp.pad(wte, ((0, Vp - V), (0, 0)))               # zero rows for padded vocab
    params = {
        # wte is tied with lm_head.weight; (Vp, C) bf16 for the embedding gather plus a
        # one-time pre-transposed (C, Vp) bf16 copy so the lm_head kernel never transposes.
        "wte": wte.astype(jnp.bfloat16),
        "wte_t": wte.T.astype(jnp.bfloat16),
        "wpe": (jax.random.normal(keys[1], (S, C), jnp.float32) * std).astype(jnp.bfloat16),
        "lnf_g": jnp.ones((1, C), jnp.float32),
        "blocks": [],
    }
    for l in range(L):
        k = jax.random.split(keys[2 + l], 4)
        wqkv = jax.random.normal(k[0], (C, 3 * C), jnp.float32) * std
        wqkv = wqkv.at[:, :C].multiply(scale)               # fold 1/sqrt(Dh) into Q columns
        params["blocks"].append(dict(
            ln1_g=jnp.ones((1, C), jnp.float32),
            # Linear weights stored pre-transposed (in, out); bias=False; bf16 storage.
            wqkv=wqkv.astype(jnp.bfloat16),
            wproj=(jax.random.normal(k[1], (C, C), jnp.float32) * std).astype(jnp.bfloat16),
            ln2_g=jnp.ones((1, C), jnp.float32),
            wfc=(jax.random.normal(k[2], (C, 4 * C), jnp.float32) * std).astype(jnp.bfloat16),
            wfc2=(jax.random.normal(k[3], (4 * C, C), jnp.float32) * std).astype(jnp.bfloat16),
        ))
    return params


def gpt_forward(params, idx, *, n_heads, vocab_size, return_padded_logits=False):
    """idx: (B, T) int32 token ids. Returns (logits (B, T, V), loss=None)."""
    vmem_limit, seq_cap, vocab_cap = _hw_defaults()
    B, T = idx.shape
    assert T <= params["wpe"].shape[0]

    tok = jnp.take(params["wte"], idx, axis=0).astype(jnp.float32)   # embedding gather (glue)
    pos = params["wpe"][:T].astype(jnp.float32)[None, :, :]
    x = tok + pos

    # Pad awkward long sequences to a multiple of 128 so a clean seq tile exists; causal
    # attention guarantees real rows are unaffected by trailing zero-padding.
    Tp = _round_up(T, 128) if T > seq_cap else T
    if Tp != T:
        x = jnp.pad(x, ((0, 0), (0, Tp - T), (0, 0)))
    tt = _seq_tile(Tp, seq_cap)

    for blk in params["blocks"]:
        x = transformer_block(x, blk, n_heads=n_heads, tt=tt, vmem_limit=vmem_limit)

    logits = final_ln_and_lm_head(x, params["lnf_g"], params["wte_t"],
                                  vocab_size=vocab_size, tt=tt,
                                  vocab_cap=vocab_cap, vmem_limit=vmem_limit)
    if not return_padded_logits:
        logits = logits[:, :T, :vocab_size]   # drop seq/vocab padding (module-exact shape)
    # TODO(synk): cross-entropy loss branch (targets is not None) not implemented; targets=None path.
    return logits, None


if __name__ == "__main__":
    # Shapes from GPTConfig (n_embed=96, vocab=65, block_size=32, 6 layers, 4 heads),
    # small batch/sequence for the smoke test.
    cfg = dict(n_embed=96, vocab_size=65, block_size=32, n_layers=6, n_heads=4)
    key = jax.random.PRNGKey(0)
    pkey, ikey = jax.random.split(key)
    params = init_params(pkey, cfg)

    B, T = 2, 16
    idx = jax.random.randint(ikey, (B, T), 0, cfg["vocab_size"], dtype=jnp.int32)

    logits, loss = gpt_forward(params, idx, n_heads=cfg["n_heads"],
                               vocab_size=cfg["vocab_size"])
    logits = jax.block_until_ready(logits)
    assert logits.shape == (B, T, cfg["vocab_size"])
    assert loss is None
    assert bool(jnp.isfinite(logits).all())
    print("KERNEL_OK")
</pallas_src>

<mosaic_0001>
module attributes {stable_mosaic.version = 11 : i64} {
  func.func @_qkv_kernel(%arg0: i32, %arg1: i32, %arg2: memref<1x16x96xf32, #tpu.memory_space<vmem>>, %arg3: memref<1x96xf32, #tpu.memory_space<vmem>>, %arg4: memref<96x288xbf16, #tpu.memory_space<vmem>>, %arg5: memref<1x4x16x24xbf16, #tpu.memory_space<vmem>>, %arg6: memref<1x4x16x24xbf16, #tpu.memory_space<vmem>>, %arg7: memref<1x4x16x24xbf16, #tpu.memory_space<vmem>>) attributes {dimension_semantics = [#tpu.dimension_semantics<parallel>, #tpu.dimension_semantics<parallel>], iteration_bounds = array<i64: 2, 1>, scalar_prefetch = 0 : i64, scratch_operands = 0 : i64, tpu.core_type = #tpu.core_type<tc>, window_params = [{transform_indices = @transform_0, window_bounds = array<i64: 1, 16, 96>}, {pipeline_mode = #tpu.pipeline_mode<synchronous>, transform_indices = @transform_1, window_bounds = array<i64: 1, 96>}, {pipeline_mode = #tpu.pipeline_mode<synchronous>, transform_indices = @transform_2, window_bounds = array<i64: 96, 288>}, {transform_indices = @transform_3, window_bounds = array<i64: 1, 4, 16, 24>}, {transform_indices = @transform_4, window_bounds = array<i64: 1, 4, 16, 24>}, {transform_indices = @transform_5, window_bounds = array<i64: 1, 4, 16, 24>}]} {
    %c0 = arith.constant 0 : index
    %c0_0 = arith.constant 0 : index
    %c0_1 = arith.constant 0 : index
    %0 = vector.load %arg2[%c0, %c0_0, %c0_1] : memref<1x16x96xf32, #tpu.memory_space<vmem>>, vector<1x16x96xf32>
    %1 = vector.shape_cast %0 : vector<1x16x96xf32> to vector<16x96xf32>
    %c0_2 = arith.constant 0 : index
    %c0_3 = arith.constant 0 : index
    %2 = vector.load %arg3[%c0_2, %c0_3] : memref<1x96xf32, #tpu.memory_space<vmem>>, vector<1x96xf32>
    %3 = vector.shape_cast %2 : vector<1x96xf32> to vector<96xf32>
    %cst = arith.constant dense<0.000000e+00> : vector<16xf32>
    %4 = vector.multi_reduction <add>, %1, %cst [1] : vector<16x96xf32> to vector<16xf32>
    %5 = vector.shape_cast %4 : vector<16xf32> to vector<16x1xf32>
    %cst_4 = arith.constant 9.600000e+01 : f32
    %6 = vector.broadcast %cst_4 : f32 to vector<16x1xf32>
    %7 = arith.divf %5, %6 : vector<16x1xf32>
    %8 = vector.broadcast %7 : vector<16x1xf32> to vector<16x96xf32>
    %9 = arith.subf %1, %8 : vector<16x96xf32>
    %10 = arith.mulf %9, %9 : vector<16x96xf32>
    %cst_5 = arith.constant dense<0.000000e+00> : vector<16xf32>
    %11 = vector.multi_reduction <add>, %10, %cst_5 [1] : vector<16x96xf32> to vector<16xf32>
    %12 = vector.shape_cast %11 : vector<16xf32> to vector<16x1xf32>
    %cst_6 = arith.constant 9.600000e+01 : f32
    %13 = vector.broadcast %cst_6 : f32 to vector<16x1xf32>
    %14 = arith.divf %12, %13 : vector<16x1xf32>
    %15 = vector.broadcast %7 : vector<16x1xf32> to vector<16x96xf32>
    %16 = arith.subf %1, %15 : vector<16x96xf32>
    %cst_7 = arith.constant 9.99999974E-6 : f32
    %17 = vector.broadcast %cst_7 : f32 to vector<16x1xf32>
    %18 = arith.addf %14, %17 : vector<16x1xf32>
    %19 = math.rsqrt %18 : vector<16x1xf32>
    %20 = vector.broadcast %19 : vector<16x1xf32> to vector<16x96xf32>
    %21 = arith.mulf %16, %20 : vector<16x96xf32>
    %22 = vector.shape_cast %3 : vector<96xf32> to vector<1x96xf32>
    %23 = vector.broadcast %22 : vector<1x96xf32> to vector<16x96xf32>
    %24 = arith.mulf %21, %23 : vector<16x96xf32>
    %25 = arith.truncf %24 : vector<16x96xf32> to vector<16x96xbf16>
    %c0_8 = arith.constant 0 : index
    %c0_9 = arith.constant 0 : index
    %26 = vector.load %arg4[%c0_8, %c0_9] : memref<96x288xbf16, #tpu.memory_space<vmem>>, vector<96x288xbf16>
    %cst_10 = arith.constant dense<0.000000e+00> : vector<16x288xf32>
    %27 = tpu.matmul %25, %26, %cst_10 {dimension_numbers = #tpu.dot_dimension_numbers<[1], [0], [0], [1], [0, 0, 1, 1], [], []>} : vector<16x96xbf16>, vector<96x288xbf16>, vector<16x288xf32> -> vector<16x288xf32>
    %28 = arith.truncf %27 : vector<16x288xf32> to vector<16x288xbf16>
    %29 = vector.extract_strided_slice %28 {offsets = [0, 0], sizes = [16, 24], strides = [1, 1]} : vector<16x288xbf16> to vector<16x24xbf16>
    %30 = vector.extract_strided_slice %28 {offsets = [0, 24], sizes = [16, 24], strides = [1, 1]} : vector<16x288xbf16> to vector<16x24xbf16>
    %31 = vector.extract_strided_slice %28 {offsets = [0, 48], sizes = [16, 24], strides = [1, 1]} : vector<16x288xbf16> to vector<16x24xbf16>
    %32 = vector.extract_strided_slice %28 {offsets = [0, 72], sizes = [16, 24], strides = [1, 1]} : vector<16x288xbf16> to vector<16x24xbf16>
    %33 = vector.shape_cast %29 : vector<16x24xbf16> to vector<1x16x24xbf16>
    %34 = vector.shape_cast %30 : vector<16x24xbf16> to vector<1x16x24xbf16>
    %35 = vector.shape_cast %31 : vector<16x24xbf16> to vector<1x16x24xbf16>
    %36 = vector.shape_cast %32 : vector<16x24xbf16> to vector<1x16x24xbf16>
    %37 = tpu.concatenate %33, %34, %35, %36 in 0 : vector<1x16x24xbf16>, vector<1x16x24xbf16>, vector<1x16x24xbf16>, vector<1x16x24xbf16> -> vector<4x16x24xbf16>
    %c0_11 = arith.constant 0 : index
    %c0_12 = arith.constant 0 : index
    %c0_13 = arith.constant 0 : index
    %c0_14 = arith.constant 0 : index
    %38 = vector.load %arg5[%c0_11, %c0_12, %c0_13, %c0_14] : memref<1x4x16x24xbf16, #tpu.memory_space<vmem>>, vector<1x4x16x24xbf16>
    %39 = vector.shape_cast %38 : vector<1x4x16x24xbf16> to vector<4x16x24xbf16>
    %40 = vector.shape_cast %37 : vector<4x16x24xbf16> to vector<1x4x16x24xbf16>
    tpu.vector_store %arg5[%c0_11, %c0_12, %c0_13, %c0_14], %40 {strides = array<i32>} : memref<1x4x16x24xbf16, #tpu.memory_space<vmem>>, vector<1x4x16x24xbf16>,
    %41 = vector.extract_strided_slice %28 {offsets = [0, 96], sizes = [16, 24], strides = [1, 1]} : vector<16x288xbf16> to vector<16x24xbf16>
    %42 = vector.extract_strided_slice %28 {offsets = [0, 120], sizes = [16, 24], strides = [1, 1]} : vector<16x288xbf16> to vector<16x24xbf16>
    %43 = vector.extract_strided_slice %28 {offsets = [0, 144], sizes = [16, 24], strides = [1, 1]} : vector<16x288xbf16> to vector<16x24xbf16>
    %44 = vector.extract_strided_slice %28 {offsets = [0, 168], sizes = [16, 24], strides = [1, 1]} : vector<16x288xbf16> to vector<16x24xbf16>
    %45 = vector.shape_cast %41 : vector<16x24xbf16> to vector<1x16x24xbf16>
    %46 = vector.shape_cast %42 : vector<16x24xbf16> to vector<1x16x24xbf16>
    %47 = vector.shape_cast %43 : vector<16x24xbf16> to vector<1x16x24xbf16>
    %48 = vector.shape_cast %44 : vector<16x24xbf16> to vector<1x16x24xbf16>
    %49 = tpu.concatenate %45, %46, %47, %48 in 0 : vector<1x16x24xbf16>, vector<1x16x24xbf16>, vector<1x16x24xbf16>, vector<1x16x24xbf16> -> vector<4x16x24xbf16>
    %c0_15 = arith.constant 0 : index
    %c0_16 = arith.constant 0 : index
    %c0_17 = arith.constant 0 : index
    %c0_18 = arith.constant 0 : index
    %50 = vector.load %arg6[%c0_15, %c0_16, %c0_17, %c0_18] : memref<1x4x16x24xbf16, #tpu.memory_space<vmem>>, vector<1x4x16x24xbf16>
    %51 = vector.shape_cast %50 : vector<1x4x16x24xbf16> to vector<4x16x24xbf16>
    %52 = vector.shape_cast %49 : vector<4x16x24xbf16> to vector<1x4x16x24xbf16>
    tpu.vector_store %arg6[%c0_15, %c0_16, %c0_17, %c0_18], %52 {strides = array<i32>} : memref<1x4x16x24xbf16, #tpu.memory_space<vmem>>, vector<1x4x16x24xbf16>,
    %53 = vector.extract_strided_slice %28 {offsets = [0, 192], sizes = [16, 24], strides = [1, 1]} : vector<16x288xbf16> to vector<16x24xbf16>
    %54 = vector.extract_strided_slice %28 {offsets = [0, 216], sizes = [16, 24], strides = [1, 1]} : vector<16x288xbf16> to vector<16x24xbf16>
    %55 = vector.extract_strided_slice %28 {offsets = [0, 240], sizes = [16, 24], strides = [1, 1]} : vector<16x288xbf16> to vector<16x24xbf16>
    %56 = vector.extract_strided_slice %28 {offsets = [0, 264], sizes = [16, 24], strides = [1, 1]} : vector<16x288xbf16> to vector<16x24xbf16>
    %57 = vector.shape_cast %53 : vector<16x24xbf16> to vector<1x16x24xbf16>
    %58 = vector.shape_cast %54 : vector<16x24xbf16> to vector<1x16x24xbf16>
    %59 = vector.shape_cast %55 : vector<16x24xbf16> to vector<1x16x24xbf16>
    %60 = vector.shape_cast %56 : vector<16x24xbf16> to vector<1x16x24xbf16>
    %61 = tpu.concatenate %57, %58, %59, %60 in 0 : vector<1x16x24xbf16>, vector<1x16x24xbf16>, vector<1x16x24xbf16>, vector<1x16x24xbf16> -> vector<4x16x24xbf16>
    %c0_19 = arith.constant 0 : index
    %c0_20 = arith.constant 0 : index
    %c0_21 = arith.constant 0 : index
    %c0_22 = arith.constant 0 : index
    %62 = vector.load %arg7[%c0_19, %c0_20, %c0_21, %c0_22] : memref<1x4x16x24xbf16, #tpu.memory_space<vmem>>, vector<1x4x16x24xbf16>
    %63 = vector.shape_cast %62 : vector<1x4x16x24xbf16> to vector<4x16x24xbf16>
    %64 = vector.shape_cast %61 : vector<4x16x24xbf16> to vector<1x4x16x24xbf16>
    tpu.vector_store %arg7[%c0_19, %c0_20, %c0_21, %c0_22], %64 {strides = array<i32>} : memref<1x4x16x24xbf16, #tpu.memory_space<vmem>>, vector<1x4x16x24xbf16>,
    return
  }
  func.func @transform_0(%arg0: i32, %arg1: i32) -> (i32, i32, i32) {
    %c0_i32 = arith.constant 0 : i32
    %c0_i32_0 = arith.constant 0 : i32
    return %arg0, %arg1, %c0_i32 : i32, i32, i32
  }
  func.func @transform_1(%arg0: i32, %arg1: i32) -> (i32, i32) {
    %c0_i32 = arith.constant 0 : i32
    %c0_i32_0 = arith.constant 0 : i32
    %c0_i32_1 = arith.constant 0 : i32
    return %c0_i32, %c0_i32_0 : i32, i32
  }
  func.func @transform_2(%arg0: i32, %arg1: i32) -> (i32, i32) {
    %c0_i32 = arith.constant 0 : i32
    %c0_i32_0 = arith.constant 0 : i32
    %c0_i32_1 = arith.constant 0 : i32
    return %c0_i32, %c0_i32_0 : i32, i32
  }
  func.func @transform_3(%arg0: i32, %arg1: i32) -> (i32, i32, i32, i32) {
    %c0_i32 = arith.constant 0 : i32
    %c0_i32_0 = arith.constant 0 : i32
    %c0_i32_1 = arith.constant 0 : i32
    return %arg0, %c0_i32, %arg1, %c0_i32_0 : i32, i32, i32, i32
  }
  func.func @transform_4(%arg0: i32, %arg1: i32) -> (i32, i32, i32, i32) {
    %c0_i32 = arith.constant 0 : i32
    %c0_i32_0 = arith.constant 0 : i32
    %c0_i32_1 = arith.constant 0 : i32
    return %arg0, %c0_i32, %arg1, %c0_i32_0 : i32, i32, i32, i32
  }
  func.func @transform_5(%arg0: i32, %arg1: i32) -> (i32, i32, i32, i32) {
    %c0_i32 = arith.constant 0 : i32
    %c0_i32_0 = arith.constant 0 : i32
    %c0_i32_1 = arith.constant 0 : i32
    return %arg0, %c0_i32, %arg1, %c0_i32_0 : i32, i32, i32, i32
  }
}

</mosaic_0001>

<llo_original>
// kernel: tpu_custom_call.1
$region0: #{tpu_custom_call.1}
  #allocation0 [shape = 'u32[]', space=smem, size = 0x4, offset = 0x4, fixed_abs, tag = 'smem constant byte address 0x4 - core index']
  #allocation1 [shape = 'u32[72,128]{1,0:T(1,128)}', space=vmem, size = 0x9000, scoped, tag = 'internal scratch']
  %s0 = inlined_call_operand.hbm [shape: f32[2,16,96], index: 0, kind: input, shape index: {}]
  %s1 = inlined_call_operand.hbm [shape: f32[1,96], index: 1, kind: input, shape index: {}]
  %s2 = inlined_call_operand.hbm [shape: bf16[96,288], index: 2, kind: input, shape index: {}]
  %s3 = inlined_call_operand.hbm [shape: bf16[2,4,16,24], index: 3, kind: output, shape index: {0}]
  %s4 = inlined_call_operand.hbm [shape: bf16[2,4,16,24], index: 4, kind: output, shape index: {1}]
  %s5 = inlined_call_operand.hbm [shape: bf16[2,4,16,24], index: 5, kind: output, shape index: {2}]
  %6 = xla_tuple %s3, %s4, %s5
  %s7 = sld [smem:[#allocation0]]
  $region73: #{tpu_custom_call.1} parent=0
    _
  %s9 = ssub.s32 1, %s7
  %s10 = scalar_select 0, %s9, %s7
  $region1: #{tpu_custom_call.1} parent=0
    #allocation2 [shape = 'u8[16384]{0}', space=vmem, size = 0x4000, scoped, tag = 'input window, operand 0']
    #allocation3 [shape = 's32[2]{0}', space=sflag, size = 0x8, scoped, tag = 'scoped memory for tpu_custom_call.1']
    #allocation4 [shape = 's32[2]{0}', space=sflag, size = 0x8, scoped, tag = 'scoped memory for tpu_custom_call.1']
    #allocation5 [shape = 'u8[512]{0}', space=vmem, size = 0x400, scoped, tag = 'input window, operand 1, single buffered']
    #allocation6 [shape = 's32[1]{0}', space=sflag, size = 0x4, scoped, tag = 'scoped memory for tpu_custom_call.1']
    #allocation7 [shape = 'u8[73728]{0}', space=vmem, size = 0x12000, scoped, tag = 'input window, operand 2, single buffered']
    #allocation8 [shape = 'u8[32768]{0}', space=vmem, size = 0x8000, scoped, tag = 'output window, operand 0']
    #allocation9 [shape = 'u8[32768]{0}', space=vmem, size = 0x8000, scoped, tag = 'output window, operand 1']
    #allocation10 [shape = 's32[2]{0}', space=sflag, size = 0x8, scoped, tag = 'scoped memory for tpu_custom_call.1']
    #allocation11 [shape = 'u8[32768]{0}', space=vmem, size = 0x8000, scoped, tag = 'output window, operand 2']
    %11 = vsyncpa [#allocation3], 0
    %s12 = scalar_lea.sflag [#allocation3], 1
    %13 = vsyncpa %s12, 0
    %14 = vsyncpa [#allocation6], 0
    %15 = vsyncpa [#allocation4], 0
    %s16 = scalar_lea.sflag [#allocation4], 1
    %17 = vsyncpa %s16, 0
    %18 = vsyncpa [#allocation10], 0
    %s19 = scalar_lea.sflag [#allocation10], 1
    %20 = vsyncpa %s19, 0
    loop: start=0, step=1, limit=4
    $region2: #{tpu_custom_call.1} parent=1 // loop_pre_header
      _
    $region3: #{tpu_custom_call.1} parent=1 // loop_header
      %s22 = sphi 0, %s26
      %p23 = scmp.ge.s32.totalorder %s22, 4
      %s29 = sphi 0, %s41
      %s30 = sphi 0, %s37
      %s31 = sphi 0, %s29
      %s32 = sphi 0, %s30
      %s33 = sphi 0, %s31
      %s34 = sphi 0, %s32
      %s46 = sphi 0, %s48
      %s49 = sphi 0, %s46
      %s50 = sphi 0, %s49
      %s66 = sphi 0, %s50
      %s70 = sphi 0, %s70
      %s72 = sphi 0, %s70
      %s73 = sphi 0, %s72
      %s87 = sphi 0, %s73
      %s91 = sphi 0, %s91
      %s93 = sphi 0, %s91
      %s94 = sphi 0, %s93
      %s108 = sphi 0, %s94
      %s116 = sphi 0, %s118
      %s119 = sphi 0, %s116
      %s120 = sphi 0, %s119
      %s136 = sphi 0, %s120
      %s144 = sphi 0, %s146
      %s147 = sphi 0, %s144
      %s148 = sphi 0, %s147
      %s164 = sphi 0, %s148
      %s172 = sphi 0, %s174
      %s175 = sphi 0, %s172
      %s176 = sphi 0, %s175
      %s192 = sphi 0, %s176
    $region4: #{tpu_custom_call.1} parent=1 // loop_header_branch
      %25 = sbr.rel (%p23) target = $region8
    $region5: #{tpu_custom_call.1} parent=1 // loop_body
      %s27 = ssub.s32 %s22, 1
      %s28 = ssub.s32 %s22, 2
      %s35 = sadd.s32 1, %s30
      %p36 = scmp.ge.s32.totalorder %s35, 1
      %s37 = scalar_select %p36, 0, %s35
      %s38 = sadd.s32 1, %s29
      %s39 = scalar_select %p36, %s38, %s29
      %p40 = scmp.ge.s32.totalorder %s39, 2
      %s41 = scalar_select %p40, 0, %s39
      %s42 = ssub.s32 %s29, %s41
      %s43 = ssub.s32 %s30, %s37
      %s44 = sor.u32 %s42, %s43
      %p45 = scmp.eq.s32.totalorder %s44, 0
      %s47 = sadd.s32 %s46, 1
      %s48 = scalar_select %p45, %s46, %s47
      %p51 = pneg %p45
      %p52 = scmp.eq.s32.totalorder %s22, 1
      %p53 = por %p51, %p52
      %p54 = scmp.ne.s32.totalorder %s46, %s49
      %p55 = scmp.eq.s32.totalorder %s22, 0
      %p56 = por %p54, %p55
      %p57 = scmp.ne.s32.totalorder %s46, %s49
      %p58 = scmp.eq.s32.totalorder %s27, 1
      %p59 = por %p57, %p58
      %p60 = scmp.ne.s32.totalorder %s49, %s50
      %p61 = scmp.eq.s32.totalorder %s27, 0
      %p62 = por %p60, %p61
      %p63 = scmp.ne.s32.totalorder %s49, %s50
      %p64 = scmp.eq.s32.totalorder %s28, 1
      %p65 = por %p63, %p64
      %p67 = scmp.ne.s32.totalorder %s50, %s66
      %p68 = scmp.eq.s32.totalorder %s28, 0
      %p69 = por %p67, %p68
      %s71 = sadd.s32 %s70, 1
      %p74 = scmp.eq.s32.totalorder %s22, 1
      %p75 = scmp.ne.s32.totalorder %s70, %s72
      %p76 = scmp.eq.s32.totalorder %s22, 0
      %p77 = por %p75, %p76
      %p78 = scmp.ne.s32.totalorder %s70, %s72
      %p79 = scmp.eq.s32.totalorder %s27, 1
      %p80 = por %p78, %p79
      %p81 = scmp.ne.s32.totalorder %s72, %s73
      %p82 = scmp.eq.s32.totalorder %s27, 0
      %p83 = por %p81, %p82
      %p84 = scmp.ne.s32.totalorder %s72, %s73
      %p85 = scmp.eq.s32.totalorder %s28, 1
      %p86 = por %p84, %p85
      %p88 = scmp.ne.s32.totalorder %s73, %s87
      %p89 = scmp.eq.s32.totalorder %s28, 0
      %p90 = por %p88, %p89
      %s92 = sadd.s32 %s91, 1
      %p95 = scmp.eq.s32.totalorder %s22, 1
      %p96 = scmp.ne.s32.totalorder %s91, %s93
      %p97 = scmp.eq.s32.totalorder %s22, 0
      %p98 = por %p96, %p97
      %p99 = scmp.ne.s32.totalorder %s91, %s93
      %p100 = scmp.eq.s32.totalorder %s27, 1
      %p101 = por %p99, %p100
      %p102 = scmp.ne.s32.totalorder %s93, %s94
      %p103 = scmp.eq.s32.totalorder %s27, 0
      %p104 = por %p102, %p103
      %p105 = scmp.ne.s32.totalorder %s93, %s94
      %p106 = scmp.eq.s32.totalorder %s28, 1
      %p107 = por %p105, %p106
      %p109 = scmp.ne.s32.totalorder %s94, %s108
      %p110 = scmp.eq.s32.totalorder %s28, 0
      %p111 = por %p109, %p110
      %s112 = ssub.s32 %s29, %s41
      %s113 = ssub.s32 %s30, %s37
      %s114 = sor.u32 %s112, %s113
      %p115 = scmp.eq.s32.totalorder %s114, 0
      %s117 = sadd.s32 %s116, 1
      %s118 = scalar_select %p115, %s116, %s117
      %p121 = pneg %p115
      %p122 = scmp.eq.s32.totalorder %s22, 1
      %p123 = por %p121, %p122
      %p124 = scmp.ne.s32.totalorder %s116, %s119
      %p125 = scmp.eq.s32.totalorder %s22, 0
      %p126 = por %p124, %p125
      %p127 = scmp.ne.s32.totalorder %s116, %s119
      %p128 = scmp.eq.s32.totalorder %s27, 1
      %p129 = por %p127, %p128
      %p130 = scmp.ne.s32.totalorder %s119, %s120
      %p131 = scmp.eq.s32.totalorder %s27, 0
      %p132 = por %p130, %p131
      %p133 = scmp.ne.s32.totalorder %s119, %s120
      %p134 = scmp.eq.s32.totalorder %s28, 1
      %p135 = por %p133, %p134
      %p137 = scmp.ne.s32.totalorder %s120, %s136
      %p138 = scmp.eq.s32.totalorder %s28, 0
      %p139 = por %p137, %p138
      %s140 = ssub.s32 %s29, %s41
      %s141 = ssub.s32 %s30, %s37
      %s142 = sor.u32 %s140, %s141
      %p143 = scmp.eq.s32.totalorder %s142, 0
      %s145 = sadd.s32 %s144, 1
      %s146 = scalar_select %p143, %s144, %s145
      %p149 = pneg %p143
      %p150 = scmp.eq.s32.totalorder %s22, 1
      %p151 = por %p149, %p150
      %p152 = scmp.ne.s32.totalorder %s144, %s147
      %p153 = scmp.eq.s32.totalorder %s22, 0
      %p154 = por %p152, %p153
      %p155 = scmp.ne.s32.totalorder %s144, %s147
      %p156 = scmp.eq.s32.totalorder %s27, 1
      %p157 = por %p155, %p156
      %p158 = scmp.ne.s32.totalorder %s147, %s148
      %p159 = scmp.eq.s32.totalorder %s27, 0
      %p160 = por %p158, %p159
      %p161 = scmp.ne.s32.totalorder %s147, %s148
      %p162 = scmp.eq.s32.totalorder %s28, 1
      %p163 = por %p161, %p162
      %p165 = scmp.ne.s32.totalorder %s148, %s164
      %p166 = scmp.eq.s32.totalorder %s28, 0
      %p167 = por %p165, %p166
      %s168 = ssub.s32 %s29, %s41
      %s169 = ssub.s32 %s30, %s37
      %s170 = sor.u32 %s168, %s169
      %p171 = scmp.eq.s32.totalorder %s170, 0
      %s173 = sadd.s32 %s172, 1
      %s174 = scalar_select %p171, %s172, %s173
      %p177 = pneg %p171
      %p178 = scmp.eq.s32.totalorder %s22, 1
      %p179 = por %p177, %p178
      %p180 = scmp.ne.s32.totalorder %s172, %s175
      %p181 = scmp.eq.s32.totalorder %s22, 0
      %p182 = por %p180, %p181
      %p183 = scmp.ne.s32.totalorder %s172, %s175
      %p184 = scmp.eq.s32.totalorder %s27, 1
      %p185 = por %p183, %p184
      %p186 = scmp.ne.s32.totalorder %s175, %s176
      %p187 = scmp.eq.s32.totalorder %s27, 0
      %p188 = por %p186, %p187
      %p189 = scmp.ne.s32.totalorder %s175, %s176
      %p190 = scmp.eq.s32.totalorder %s28, 1
      %p191 = por %p189, %p190
      %p193 = scmp.ne.s32.totalorder %s176, %s192
      %p194 = scmp.eq.s32.totalorder %s28, 0
      %p195 = por %p193, %p194
      %p196 = scmp.le.s32.totalorder 1, %s22
      %p197 = scmp.lt.s32.totalorder %s22, 3
      %p198 = pnand %p196, %p197
      %p199 = pneg %p198
      // Predicated region
      $region9: #{tpu_custom_call.1} parent=5 // pred_check
        _
      $region10: #{tpu_custom_call.1} parent=5 // pred_check_branch
        %201 = sbr.rel (%p198) target = $region12
      $region11: #{tpu_custom_call.1} parent=5 // pred_region
        %s202 = ssub.s32 %s22, 1
        // Predicated region
        $region13: #{tpu_custom_call.1} parent=11 // pred_check
          %p203 = pneg %p83
        $region14: #{tpu_custom_call.1} parent=11 // pred_check_branch
          %205 = sbr.rel (%p203) target = $region16
        $region15: #{tpu_custom_call.1} parent=11 // pred_region
          %207 = vsyncadd [#allocation6], 0
          %s209 = sshll.u32 %s1, 4
          %s210 = int_to_ptr.hbm [resolvable:$true] %s209
          %s211 = sshll.u32 [#allocation5], 4
          %s212 = int_to_ptr.vmem [resolvable:$true] %s211
          %214 = dma.hbm_to_vmem [thread:$0]  %s210, 16, %s212, [#allocation6]
        $region16: #{tpu_custom_call.1} parent=11 // pred_fallthru
          _
        // Predicated region
        $region17: #{tpu_custom_call.1} parent=11 // pred_check
          %p215 = pneg %p104
        $region18: #{tpu_custom_call.1} parent=11 // pred_check_branch
          %217 = sbr.rel (%p215) target = $region20
        $region19: #{tpu_custom_call.1} parent=11 // pred_region
          %219 = vsyncadd [#allocation6], 0
          %s220 = sshll.u32 %s2, 4
          %s221 = int_to_ptr.hbm [resolvable:$true] %s220
          %s222 = sshll.u32 [#allocation7], 4
          %s223 = int_to_ptr.vmem [resolvable:$true] %s222
          %228 = dma.hbm_to_vmem [thread:$0]  %s221, 2304, %s223, [#allocation6], 192, 192, 12
        $region20: #{tpu_custom_call.1} parent=11 // pred_fallthru
          _
      $region12: #{tpu_custom_call.1} parent=5 // pred_fallthru
        _
      %p229 = scmp.lt.s32.totalorder %s22, 2
      // Predicated region
      $region21: #{tpu_custom_call.1} parent=5 // pred_check
        %p230 = pneg %p229
      $region22: #{tpu_custom_call.1} parent=5 // pred_check_branch
        %232 = sbr.rel (%p230) target = $region24
      $region23: #{tpu_custom_call.1} parent=5 // pred_region
        // Predicated region
        $region25: #{tpu_custom_call.1} parent=23 // pred_check
          %p233 = pneg %p56
        $region26: #{tpu_custom_call.1} parent=23 // pred_check_branch
          %235 = sbr.rel (%p233) target = $region28
        $region27: #{tpu_custom_call.1} parent=23 // pred_region
          %s236 = sand.u32 %s46, 1
          %s237 = scalar_lea.sflag [#allocation3], %s236
          %s238 = sand.u32 %s46, 1
          %s239 = smul.addr %s238, 16
          %s240 = scalar_lea.vmem [#allocation2], %s239
          %s241 = smul.u32 2, %s30
          %243 = vsyncadd %s237, 0
          %s244 = smul.addr %s29, 2
          %s245 = sadd.s32 %s241, %s244
          %s246 = smul.addr %s245, 8
          %s247 = scalar_lea.hbm %s0, %s246
          %s248 = sshll.u32 %s247, 4
          %s249 = int_to_ptr.hbm [resolvable:$true] %s248
          %s250 = sshll.u32 %s240, 4
          %s251 = int_to_ptr.vmem [resolvable:$true] %s250
          %256 = dma.hbm_to_vmem [thread:$0]  %s249, 256, %s251, %s237, 128, 128, 8
        $region28: #{tpu_custom_call.1} parent=23 // pred_fallthru
          _
      $region24: #{tpu_custom_call.1} parent=5 // pred_fallthru
        _
      %p257 = scmp.le.s32.totalorder 1, %s22
      %p258 = scmp.lt.s32.totalorder %s22, 3
      %p259 = pnand %p257, %p258
      %p260 = pneg %p259
      // Predicated region
      $region29: #{tpu_custom_call.1} parent=5 // pred_check
        _
      $region30: #{tpu_custom_call.1} parent=5 // pred_check_branch
        %262 = sbr.rel (%p259) target = $region32
      $region31: #{tpu_custom_call.1} parent=5 // pred_region
        %s263 = ssub.s32 %s22, 1
        %s264 = sand.u32 %s49, 1
        %s265 = scalar_lea.sflag [#allocation3], %s264
        %s266 = sand.u32 %s49, 1
        %s267 = smul.addr %s266, 16
        %s268 = scalar_lea.vmem [#allocation2], %s267
        // Predicated region
        $region33: #{tpu_custom_call.1} parent=31 // pred_check
          %p269 = pneg %p62
        $region34: #{tpu_custom_call.1} parent=31 // pred_check_branch
          %271 = sbr.rel (%p269) target = $region36
        $region35: #{tpu_custom_call.1} parent=31 // pred_region
          %273 = dma.done %s265, 256
        $region36: #{tpu_custom_call.1} parent=31 // pred_fallthru
          _
        // Predicated region
        $region37: #{tpu_custom_call.1} parent=31 // pred_check
          %p274 = pneg %p83
        $region38: #{tpu_custom_call.1} parent=31 // pred_check_branch
          %276 = sbr.rel (%p274) target = $region40
        $region39: #{tpu_custom_call.1} parent=31 // pred_region
          %278 = dma.done [#allocation6], 16
        $region40: #{tpu_custom_call.1} parent=31 // pred_fallthru
          _
        // Predicated region
        $region41: #{tpu_custom_call.1} parent=31 // pred_check
          %p279 = pneg %p104
        $region42: #{tpu_custom_call.1} parent=31 // pred_check_branch
          %281 = sbr.rel (%p279) target = $region44
        $region43: #{tpu_custom_call.1} parent=31 // pred_region
          %283 = dma.done [#allocation6], 2304
        $region44: #{tpu_custom_call.1} parent=31 // pred_fallthru
          _
        %s284 = sand.u32 %s49, 1
        %s285 = scalar_lea.sflag [#allocation3], %s284
        %s286 = sand.u32 %s49, 1
        %s287 = smul.addr %s286, 16
        %s288 = scalar_lea.vmem [#allocation2], %s287
        %p289 = pneg %p62
        %p290 = pneg %p59
        %p291 = pneg %p83
        %p292 = pneg %p80
        %p293 = pneg %p104
        %p294 = pneg %p101
        %p295 = pneg %p132
        %p296 = pneg %p129
        %s297 = sand.u32 %s119, 1
        %s298 = scalar_lea.sflag [#allocation4], %s297
        %s299 = sand.u32 %s119, 1
        %s300 = smul.addr %s299, 32
        %s301 = scalar_lea.vmem [#allocation8], %s300
        %p302 = pneg %p160
        %p303 = pneg %p157
        %s304 = sand.u32 %s27, 1
        %s305 = scalar_lea.sflag [#allocation10], %s304
        %s306 = sand.u32 %s147, 1
        %s307 = smul.addr %s306, 32
        %s308 = scalar_lea.vmem [#allocation9], %s307
        %p309 = pneg %p188
        %p310 = pneg %p185
        %s311 = sand.u32 %s27, 1
        %s312 = scalar_lea.sflag [#allocation10], %s311
        %s313 = sand.u32 %s175, 1
        %s314 = smul.addr %s313, 32
        %s315 = scalar_lea.vmem [#allocation11], %s314
        %s316 = smul.u32 2, %s32
        %s317 = smul.u32 2, %s32
        %s318 = smul.u32 2, %s32
        %s319 = smul.u32 2, %s32
        %v321 = vld [vmem:[%s268] sm:$0xff]
        %v322 = vld [vmem:[%s268 + $0x8] sm:$0xff]
        %v323 = vld [vmem:[#allocation5] sm:$0x1]
        %vm324 = vcmask 785408
        %v325 = vsel %vm324, %v321, 0.0
        %326 = vadd.xlane.f32.xlu0 %v325
        %v327 = vpop.xlane.xlu0 %326
        %v328 = vsel %vm324, %v322, 0.0
        %329 = vadd.xlane.f32.xlu0 %v328
        %v330 = vpop.xlane.xlu0 %329
        %v331 = vrcp.pop 96.0
        %v332 = vmul.f32 96.0, %v331
        %v333 = vsub.f32 1.0, %v332
        %v334 = vmul.f32 %v331, %v333
        %v335 = vadd.f32 %v331, %v334
        %vm336 = vweird.f32 %v331
        %v337 = vsel %vm336, %v331, %v335
        %v338 = vmul.f32 %v327, %v337
        %v339 = vmul.f32 %v330, %v337
        %v340 = vsub.f32 %v321, %v338
        %v341 = vsub.f32 %v322, %v339
        %v342 = vmul.f32 %v340, %v340
        %v343 = vmul.f32 %v341, %v341
        %v344 = vsel %vm324, %v342, 0.0
        %345 = vadd.xlane.f32.xlu0 %v344
        %v346 = vpop.xlane.xlu0 %345
        %v347 = vsel %vm324, %v343, 0.0
        %348 = vadd.xlane.f32.xlu0 %v347
        %v349 = vpop.xlane.xlu0 %348
        %v350 = vmul.f32 %v346, %v337
        %v351 = vmul.f32 %v349, %v337
        %v352 = vadd.f32 %v350, 1e-05
        %v353 = vadd.f32 %v351, 1e-05
        %v354 = vrsqrt.pop %v352
        %v355 = vmul.f32 %v354, %v352
        %v356 = vmul.f32 %v355, %v354
        %v357 = vmul.f32 0.5, %v356
        %v358 = vsub.f32 1.5, %v357
        %v359 = vmul.f32 %v354, %v358
        %vm360 = vweird.f32 %v352
        %vm361 = vweird.f32 %v354
        %vm362 = vmor %vm360, %vm361
        %v363 = vsel %vm362, %v354, %v359
        %v364 = vrsqrt.pop %v353
        %v365 = vmul.f32 %v364, %v353
        %v366 = vmul.f32 %v365, %v364
        %v367 = vmul.f32 0.5, %v366
        %v368 = vsub.f32 1.5, %v367
        %v369 = vmul.f32 %v364, %v368
        %vm370 = vweird.f32 %v353
        %vm371 = vweird.f32 %v364
        %vm372 = vmor %vm370, %vm371
        %v373 = vsel %vm372, %v364, %v369
        %v374 = vmul.f32 %v340, %v363
        %v375 = vmul.f32 %v341, %v373
        %v377 = vperm.slane %v323, 0
        %v379 = vmul.f32 %v374, %v377
        %v380 = vmul.f32 %v375, %v377
        %v381 = vpack.c.bf16 %v380, %v379
        %v382 = vld [vmem:[#allocation7] sm:$0xff]
        %v383 = vld [vmem:[#allocation7 + $0x8] sm:$0xf]
        %v384 = vld [vmem:[#allocation7 + $0xc] sm:$0xff]
        %v385 = vld [vmem:[#allocation7 + $0x14] sm:$0xf]
        %v386 = vld [vmem:[#allocation7 + $0x18] sm:$0xff]
        %v387 = vld [vmem:[#allocation7 + $0x20] sm:$0xf]
        %v388 = vld [vmem:[#allocation7 + $0x24] sm:$0xff]
        %v389 = vld [vmem:[#allocation7 + $0x2c] sm:$0xf]
        %v390 = vld [vmem:[#allocation7 + $0x30] sm:$0xff]
        %v391 = vld [vmem:[#allocation7 + $0x38] sm:$0xf]
        %v392 = vld [vmem:[#allocation7 + $0x3c] sm:$0xff]
        %v393 = vld [vmem:[#allocation7 + $0x44] sm:$0xf]
        %v394 = vld [vmem:[#allocation7 + $0x48] sm:$0xff]
        %v395 = vld [vmem:[#allocation7 + $0x50] sm:$0xf]
        %v396 = vld [vmem:[#allocation7 + $0x54] sm:$0xff]
        %v397 = vld [vmem:[#allocation7 + $0x5c] sm:$0xf]
        %v398 = vld [vmem:[#allocation7 + $0x60] sm:$0xff]
        %v399 = vld [vmem:[#allocation7 + $0x68] sm:$0xf]
        %v400 = vld [vmem:[#allocation7 + $0x6c] sm:$0xff]
        %v401 = vld [vmem:[#allocation7 + $0x74] sm:$0xf]
        %v402 = vld [vmem:[#allocation7 + $0x78] sm:$0xff]
        %v403 = vld [vmem:[#allocation7 + $0x80] sm:$0xf]
        %v404 = vld [vmem:[#allocation7 + $0x84] sm:$0xff]
        %v405 = vld [vmem:[#allocation7 + $0x8c] sm:$0xf]
        %v430 = vunpack.c.l.b16 %v382
        %v431 = vunpack.c.h.b16 %v382
        %v432 = vunpack.c.l.b16 %v383
        %v433 = vunpack.c.l.b16 %v384
        %v434 = vunpack.c.h.b16 %v384
        %v435 = vunpack.c.l.b16 %v385
        %v436 = vunpack.c.l.b16 %v386
        %v437 = vunpack.c.h.b16 %v386
        %v438 = vunpack.c.l.b16 %v387
        %v439 = vunpack.c.l.b16 %v388
        %v440 = vunpack.c.h.b16 %v388
        %v441 = vunpack.c.l.b16 %v389
        %v442 = vunpack.c.l.b16 %v390
        %v443 = vunpack.c.h.b16 %v390
        %v444 = vunpack.c.l.b16 %v391
        %v445 = vunpack.c.l.b16 %v392
        %v446 = vunpack.c.h.b16 %v392
        %v447 = vunpack.c.l.b16 %v393
        %v448 = vunpack.c.l.b16 %v394
        %v449 = vunpack.c.h.b16 %v394
        %v450 = vunpack.c.l.b16 %v395
        %v451 = vunpack.c.l.b16 %v396
        %v452 = vunpack.c.h.b16 %v396
        %v453 = vunpack.c.l.b16 %v397
        %v454 = vunpack.c.l.b16 %v398
        %v455 = vunpack.c.h.b16 %v398
        %v456 = vunpack.c.l.b16 %v399
        %v457 = vunpack.c.l.b16 %v400
        %v458 = vunpack.c.h.b16 %v400
        %v459 = vunpack.c.l.b16 %v401
        %v460 = vunpack.c.l.b16 %v402
        %v461 = vunpack.c.h.b16 %v402
        %v462 = vunpack.c.l.b16 %v403
        %v463 = vunpack.c.l.b16 %v404
        %v464 = vunpack.c.h.b16 %v404
        %v465 = vunpack.c.l.b16 %v405
        %v466 = vpack.c.b16 %v433, %v430
        %v467 = vpack.c.b16 %v434, %v431
        %v468 = vpack.c.b16 %v435, %v432
        %v469 = vpack.c.b16 %v439, %v436
        %v470 = vpack.c.b16 %v440, %v437
        %v471 = vpack.c.b16 %v441, %v438
        %v472 = vpack.c.b16 %v445, %v442
        %v473 = vpack.c.b16 %v446, %v443
        %v474 = vpack.c.b16 %v447, %v444
        %v475 = vpack.c.b16 %v451, %v448
        %v476 = vpack.c.b16 %v452, %v449
        %v477 = vpack.c.b16 %v453, %v450
        %v478 = vpack.c.b16 %v457, %v454
        %v479 = vpack.c.b16 %v458, %v455
        %v480 = vpack.c.b16 %v459, %v456
        %v481 = vpack.c.b16 %v463, %v460
        %v482 = vpack.c.b16 %v464, %v461
        %v483 = vpack.c.b16 %v465, %v462
        %v503 = vsel %vm324, %v381, 0
        %505 = vmatpush.bf16.msra.mxu0 0
        %506 = vmatpush.bf16.msra.mxu0 0
        %507 = vmatpush.bf16.msra.mxu0 %v481
        %508 = vmatpush.bf16.msra.mxu0 %v478
        %509 = vmatpush.bf16.msra.mxu0 %v475
        %510 = vmatpush.bf16.msra.mxu0 %v472
        %511 = vmatpush.bf16.msra.mxu0 %v469
        %512 = vmatpush.bf16.msra.mxu0 %v466
        %513 = vmatmul.bf16.gmra.mxu0 %v503
        %v514 = vpop.f32.mrf.mxu0
        %v515 = vadd.f32 0.0, %v514
        %v516 = vpop.f32.mrf.mxu0
        %v517 = vadd.f32 0.0, %v516
        %518 = vdwg.mxu0
        %519 = vmatpush.bf16.msra.mxu0 0
        %520 = vmatpush.bf16.msra.mxu0 0
        %521 = vmatpush.bf16.msra.mxu0 %v482
        %522 = vmatpush.bf16.msra.mxu0 %v479
        %523 = vmatpush.bf16.msra.mxu0 %v476
        %524 = vmatpush.bf16.msra.mxu0 %v473
        %525 = vmatpush.bf16.msra.mxu0 %v470
        %526 = vmatpush.bf16.msra.mxu0 %v467
        %527 = vmatmul.bf16.gmra.mxu0 %v503
        %v528 = vpop.f32.mrf.mxu0
        %v529 = vadd.f32 0.0, %v528
        %v530 = vpop.f32.mrf.mxu0
        %v531 = vadd.f32 0.0, %v530
        %532 = vdwg.mxu0
        %533 = vmatpush.bf16.msra.mxu0 0
        %534 = vmatpush.bf16.msra.mxu0 0
        %535 = vmatpush.bf16.msra.mxu0 %v483
        %536 = vmatpush.bf16.msra.mxu0 %v480
        %537 = vmatpush.bf16.msra.mxu0 %v477
        %538 = vmatpush.bf16.msra.mxu0 %v474
        %539 = vmatpush.bf16.msra.mxu0 %v471
        %540 = vmatpush.bf16.msra.mxu0 %v468
        %541 = vmatmul.bf16.gmra.mxu0 %v503
        %v542 = vpop.f32.mrf.mxu0
        %v543 = vadd.f32 0.0, %v542
        %v544 = vpop.f32.mrf.mxu0
        %v545 = vadd.f32 0.0, %v544
        %546 = vdwg.mxu0
        %v547 = vpack.c.bf16 %v529, %v515
        %v548 = vpack.c.bf16 %v543, %v543
        %v549 = vpack.c.bf16 %v531, %v517
        %v550 = vpack.c.bf16 %v545, %v545
        %553 = vrot.lane.b32.xlu0 %v547, 104
        %v554 = vpop.permute.xlu0 %553
        %555 = vrot.lane.b32.xlu0 %v549, 104
        %v556 = vpop.permute.xlu0 %555
        %559 = vrot.lane.b32.xlu0 %v547, 80
        %v560 = vpop.permute.xlu0 %559
        %561 = vrot.lane.b32.xlu0 %v549, 80
        %v562 = vpop.permute.xlu0 %561
        %565 = vrot.lane.b32.xlu0 %v547, 56
        %v566 = vpop.permute.xlu0 %565
        %567 = vrot.lane.b32.xlu0 %v549, 56
        %v568 = vpop.permute.xlu0 %567
        %vm571 = vcmask 191488
        %572 = vst.msk [vmem:[%s301] sm:$0xf] %vm571, %v547
        %573 = vst.msk [vmem:[%s301 + $0x4] sm:$0xf] %vm571, %v549
        %574 = vst.msk [vmem:[%s301 + $0x8] sm:$0xf] %vm571, %v554
        %575 = vst.msk [vmem:[%s301 + $0xc] sm:$0xf] %vm571, %v556
        %576 = vst.msk [vmem:[%s301 + $0x10] sm:$0xf] %vm571, %v560
        %577 = vst.msk [vmem:[%s301 + $0x14] sm:$0xf] %vm571, %v562
        %578 = vst.msk [vmem:[%s301 + $0x18] sm:$0xf] %vm571, %v566
        %579 = vst.msk [vmem:[%s301 + $0x1c] sm:$0xf] %vm571, %v568
        %580 = vrot.lane.b32.xlu0 %v547, 112
        %v581 = vpop.permute.xlu0 %580
        %582 = vrot.lane.b32.xlu0 %v549, 112
        %v583 = vpop.permute.xlu0 %582
        %v584 = vrot.slane %v581, 4
        %v585 = vrot.slane %v583, 4
        %586 = vrot.lane.b32.xlu0 %v547, 88
        %v587 = vpop.permute.xlu0 %586
        %588 = vrot.lane.b32.xlu0 %v549, 88
        %v589 = vpop.permute.xlu0 %588
        %v590 = vrot.slane %v587, 4
        %v591 = vrot.slane %v589, 4
        %v592 = vrot.slane %v554, 4
        %v593 = vrot.slane %v556, 4
        %vm594 = vcmask 850944
        %v595 = vsel %vm594, %v554, %v592
        %v596 = vsel %vm594, %v556, %v593
        %597 = vrot.lane.b32.xlu0 %v584, 96
        %v598 = vpop.permute.xlu0 %597
        %599 = vrot.lane.b32.xlu0 %v585, 96
        %v600 = vpop.permute.xlu0 %599
        %601 = vrot.lane.b32.xlu0 %v590, 96
        %v602 = vpop.permute.xlu0 %601
        %603 = vrot.lane.b32.xlu0 %v591, 96
        %v604 = vpop.permute.xlu0 %603
        %605 = vrot.lane.b32.xlu0 %v547, 32
        %v606 = vpop.permute.xlu0 %605
        %607 = vrot.lane.b32.xlu0 %v549, 32
        %v608 = vpop.permute.xlu0 %607
        %609 = vrot.lane.b32.xlu0 %v595, 32
        %v610 = vpop.permute.xlu0 %609
        %611 = vrot.lane.b32.xlu0 %v596, 32
        %v612 = vpop.permute.xlu0 %611
        %613 = vrot.lane.b32.xlu0 %v598, 32
        %v614 = vpop.permute.xlu0 %613
        %615 = vrot.lane.b32.xlu0 %v600, 32
        %v616 = vpop.permute.xlu0 %615
        %617 = vrot.lane.b32.xlu0 %v602, 32
        %v618 = vpop.permute.xlu0 %617
        %619 = vrot.lane.b32.xlu0 %v604, 32
        %v620 = vpop.permute.xlu0 %619
        %629 = vst.msk [vmem:[%s308] sm:$0xf] %vm571, %v606
        %630 = vst.msk [vmem:[%s308 + $0x4] sm:$0xf] %vm571, %v608
        %631 = vst.msk [vmem:[%s308 + $0x8] sm:$0xf] %vm571, %v610
        %632 = vst.msk [vmem:[%s308 + $0xc] sm:$0xf] %vm571, %v612
        %633 = vst.msk [vmem:[%s308 + $0x10] sm:$0xf] %vm571, %v614
        %634 = vst.msk [vmem:[%s308 + $0x14] sm:$0xf] %vm571, %v616
        %635 = vst.msk [vmem:[%s308 + $0x18] sm:$0xf] %vm571, %v618
        %636 = vst.msk [vmem:[%s308 + $0x1c] sm:$0xf] %vm571, %v620
        %637 = vrot.lane.b32.xlu0 %v547, 64
        %v638 = vpop.permute.xlu0 %637
        %639 = vrot.lane.b32.xlu0 %v549, 64
        %v640 = vpop.permute.xlu0 %639
        %v641 = vrot.slane %v638, 4
        %v642 = vrot.slane %v640, 4
        %645 = vrot.lane.b32.xlu0 %v547, 40
        %v646 = vpop.permute.xlu0 %645
        %647 = vrot.lane.b32.xlu0 %v549, 40
        %v648 = vpop.permute.xlu0 %647
        %v649 = vrot.slane %v646, 4
        %v650 = vrot.slane %v648, 4
        %655 = vrot.lane.b32.xlu0 %v547, 16
        %v656 = vpop.permute.xlu0 %655
        %657 = vrot.lane.b32.xlu0 %v548, 16
        %v658 = vpop.permute.xlu0 %657
        %659 = vrot.lane.b32.xlu0 %v549, 16
        %v660 = vpop.permute.xlu0 %659
        %661 = vrot.lane.b32.xlu0 %v550, 16
        %v662 = vpop.permute.xlu0 %661
        %v663 = vrot.slane %v656, 4
        %v664 = vrot.slane %v660, 4
        %vm665 = vcmask 130048
        %v666 = vsel %vm665, %v663, %v658
        %v667 = vsel %vm665, %v664, %v662
        %670 = vrot.lane.b32.xlu0 %v548, 120
        %v671 = vpop.permute.xlu0 %670
        %672 = vrot.lane.b32.xlu0 %v550, 120
        %v673 = vpop.permute.xlu0 %672
        %676 = vst.msk [vmem:[%s315] sm:$0xf] %vm571, %v641
        %677 = vst.msk [vmem:[%s315 + $0x4] sm:$0xf] %vm571, %v642
        %678 = vst.msk [vmem:[%s315 + $0x8] sm:$0xf] %vm571, %v649
        %679 = vst.msk [vmem:[%s315 + $0xc] sm:$0xf] %vm571, %v650
        %680 = vst.msk [vmem:[%s315 + $0x10] sm:$0xf] %vm571, %v666
        %681 = vst.msk [vmem:[%s315 + $0x14] sm:$0xf] %vm571, %v667
        %682 = vst.msk [vmem:[%s315 + $0x18] sm:$0xf] %vm571, %v671
        %683 = vst.msk [vmem:[%s315 + $0x1c] sm:$0xf] %vm571, %v673
        %s684 = sand.u32 %s119, 1
        %s685 = scalar_lea.sflag [#allocation4], %s684
        %s686 = sand.u32 %s119, 1
        %s687 = smul.addr %s686, 32
        %s688 = scalar_lea.vmem [#allocation8], %s687
        %s689 = sand.u32 %s27, 1
        %s690 = scalar_lea.sflag [#allocation10], %s689
        %s691 = sand.u32 %s147, 1
        %s692 = smul.addr %s691, 32
        %s693 = scalar_lea.vmem [#allocation9], %s692
        %s694 = sand.u32 %s27, 1
        %s695 = scalar_lea.sflag [#allocation10], %s694
        %s696 = sand.u32 %s175, 1
        %s697 = smul.addr %s696, 32
        %s698 = scalar_lea.vmem [#allocation11], %s697
        // Predicated region
        $region45: #{tpu_custom_call.1} parent=31 // pred_check
          %p699 = pneg %p129
        $region46: #{tpu_custom_call.1} parent=31 // pred_check_branch
          %701 = sbr.rel (%p699) target = $region48
        $region47: #{tpu_custom_call.1} parent=31 // pred_region
          %s702 = smul.u32 2, %s32
          %704 = vsyncadd %s685, 0
          %s705 = smul.addr %s31, 8
          %s706 = sadd.s32 %s702, %s705
          %s707 = smul.addr %s706, 4
          %s708 = scalar_lea.hbm %s3, %s707
          %s709 = sshll.u32 %s688, 4
          %s710 = int_to_ptr.vmem [resolvable:$true] %s709
          %s711 = sshll.u32 %s708, 4
          %s712 = int_to_ptr.hbm [resolvable:$true] %s711
          %717 = dma.vmem_to_hbm [thread:$0]  %s710, 512, %s712, %s685, 64, 64, 4
        $region48: #{tpu_custom_call.1} parent=31 // pred_fallthru
          _
        // Predicated region
        $region49: #{tpu_custom_call.1} parent=31 // pred_check
          %p718 = pneg %p157
        $region50: #{tpu_custom_call.1} parent=31 // pred_check_branch
          %720 = sbr.rel (%p718) target = $region52
        $region51: #{tpu_custom_call.1} parent=31 // pred_region
          %s721 = smul.u32 2, %s32
          %723 = vsyncadd %s690, 0
          %s724 = smul.addr %s31, 8
          %s725 = sadd.s32 %s721, %s724
          %s726 = smul.addr %s725, 4
          %s727 = scalar_lea.hbm %s4, %s726
          %s728 = sshll.u32 %s693, 4
          %s729 = int_to_ptr.vmem [resolvable:$true] %s728
          %s730 = sshll.u32 %s727, 4
          %s731 = int_to_ptr.hbm [resolvable:$true] %s730
          %736 = dma.vmem_to_hbm [thread:$0]  %s729, 512, %s731, %s690, 64, 64, 4
        $region52: #{tpu_custom_call.1} parent=31 // pred_fallthru
          _
        // Predicated region
        $region53: #{tpu_custom_call.1} parent=31 // pred_check
          %p737 = pneg %p185
        $region54: #{tpu_custom_call.1} parent=31 // pred_check_branch
          %739 = sbr.rel (%p737) target = $region56
        $region55: #{tpu_custom_call.1} parent=31 // pred_region
          %s740 = smul.u32 2, %s32
          %742 = vsyncadd %s695, 0
          %s743 = smul.addr %s31, 8
          %s744 = sadd.s32 %s740, %s743
          %s745 = smul.addr %s744, 4
          %s746 = scalar_lea.hbm %s5, %s745
          %s747 = sshll.u32 %s698, 4
          %s748 = int_to_ptr.vmem [resolvable:$true] %s747
          %s749 = sshll.u32 %s746, 4
          %s750 = int_to_ptr.hbm [resolvable:$true] %s749
          %755 = dma.vmem_to_hbm [thread:$0]  %s748, 512, %s750, %s695, 64, 64, 4
        $region56: #{tpu_custom_call.1} parent=31 // pred_fallthru
          _
      $region32: #{tpu_custom_call.1} parent=5 // pred_fallthru
        _
      %p756 = scmp.le.s32.totalorder 2, %s22
      // Predicated region
      $region57: #{tpu_custom_call.1} parent=5 // pred_check
        %p757 = pneg %p756
      $region58: #{tpu_custom_call.1} parent=5 // pred_check_branch
        %759 = sbr.rel (%p757) target = $region60
      $region59: #{tpu_custom_call.1} parent=5 // pred_region
        %s760 = ssub.s32 %s22, 2
        // Predicated region
        $region61: #{tpu_custom_call.1} parent=59 // pred_check
          %p761 = pneg %p135
        $region62: #{tpu_custom_call.1} parent=59 // pred_check_branch
          %763 = sbr.rel (%p761) target = $region64
        $region63: #{tpu_custom_call.1} parent=59 // pred_region
          %s764 = sand.u32 %s120, 1
          %s765 = scalar_lea.sflag [#allocation4], %s764
          %s766 = sand.u32 %s120, 1
          %s767 = smul.addr %s766, 32
          %s768 = scalar_lea.vmem [#allocation8], %s767
          %770 = dma.done %s765, 512
        $region64: #{tpu_custom_call.1} parent=59 // pred_fallthru
          _
        // Predicated region
        $region65: #{tpu_custom_call.1} parent=59 // pred_check
          %p771 = pneg %p163
        $region66: #{tpu_custom_call.1} parent=59 // pred_check_branch
          %773 = sbr.rel (%p771) target = $region68
        $region67: #{tpu_custom_call.1} parent=59 // pred_region
          %s774 = sand.u32 %s28, 1
          %s775 = scalar_lea.sflag [#allocation10], %s774
          %s776 = sand.u32 %s148, 1
          %s777 = smul.addr %s776, 32
          %s778 = scalar_lea.vmem [#allocation9], %s777
          %780 = dma.done %s775, 512
        $region68: #{tpu_custom_call.1} parent=59 // pred_fallthru
          _
        // Predicated region
        $region69: #{tpu_custom_call.1} parent=59 // pred_check
          %p781 = pneg %p191
        $region70: #{tpu_custom_call.1} parent=59 // pred_check_branch
          %783 = sbr.rel (%p781) target = $region72
        $region71: #{tpu_custom_call.1} parent=59 // pred_region
          %s784 = sand.u32 %s28, 1
          %s785 = scalar_lea.sflag [#allocation10], %s784
          %s786 = sand.u32 %s176, 1
          %s787 = smul.addr %s786, 32
          %s788 = scalar_lea.vmem [#allocation11], %s787
          %790 = dma.done %s785, 512
        $region72: #{tpu_custom_call.1} parent=59 // pred_fallthru
          _
      $region60: #{tpu_custom_call.1} parent=5 // pred_fallthru
        _
    $region6: #{tpu_custom_call.1} parent=1 // loop_footer
      %s26 = sadd.s32 1, %s22
    $region7: #{tpu_custom_call.1} parent=1 // loop_footer_branch
      %21 = sbr.rel target = $region3
    $region8: #{tpu_custom_call.1} parent=1 // loop_exit
      _
    %791 = vsyncpa [#allocation3], 1
    %s792 = scalar_lea.sflag [#allocation3], 1
    %793 = vsyncpa %s792, 1
    %794 = vsyncpa [#allocation6], 1
    %795 = vsyncpa [#allocation4], 1
    %s796 = scalar_lea.sflag [#allocation4], 1
    %797 = vsyncpa %s796, 1
    %798 = vsyncpa [#allocation10], 1
    %s799 = scalar_lea.sflag [#allocation10], 1
    %800 = vsyncpa %s799, 1

</llo_original>
